<compile_context>
chip_gen: v6e
topology: v6e:2x2x1
jax: 0.10.0
libtpu: 0.0.40
codegen_flags: <defaults>
</compile_context>

<pallas_src>
import math
import functools

import jax
import jax.numpy as jnp
from jax.experimental import pallas as pl
from jax.experimental.pallas import tpu as pltpu


# ----------------------------------------------------------------------------- #
# Parameter setup (identical math to the PyTorch __init__)
# ----------------------------------------------------------------------------- #
def make_positional_encoding(d_model: int, max_len: int = 5000) -> jnp.ndarray:
    """Deterministic sinusoidal PE table, identical to the PyTorch buffer."""
    position = jnp.arange(0, max_len, dtype=jnp.float32)[:, None]          # (max_len, 1)
    div_term = jnp.exp(
        jnp.arange(0, d_model, 2, dtype=jnp.float32) * (-math.log(10000.0) / d_model)
    )                                                                       # (ceil(d/2),)
    pe = jnp.zeros((max_len, d_model), dtype=jnp.float32)
    pe = pe.at[:, 0::2].set(jnp.sin(position * div_term))
    # cos fills the odd columns; there are d_model//2 of them (handles odd d_model too).
    pe = pe.at[:, 1::2].set(jnp.cos(position * div_term[: d_model // 2]))
    return pe                                                               # (max_len, d_model)


# ----------------------------------------------------------------------------- #
# Kernel (shared by both paths): broadcasted elementwise add
# ----------------------------------------------------------------------------- #
def _add_pe_kernel(x_ref, pe_ref, o_ref):
    # x_ref: (1, TS, D) or (B, S, D); pe_ref: (TS, D) / (S, D).
    # Trailing-dim broadcasting handles both.
    o_ref[...] = x_ref[...] + pe_ref[...]


_VMEM_LIMIT_BYTES = 32 * 1024 * 1024     # safe on v5e/v6e (128 MiB) and v7x (64 MiB)
_TARGET_BLOCK_BYTES = 2 * 1024 * 1024    # ~2 MiB x-blocks: 3 streams x 2 bufs ~ 12 MiB
_SMALL_BYTES = 256 * 1024                # below this, use a single-block call


def _min_row_multiple(itemsize: int) -> int:
    # Sublane packing: 8 rows for 32-bit, 16 for 16-bit, 32 for 8-bit dtypes.
    return max(8, 32 // itemsize)


def _add_pe_single_block(x, pe):
    B, S, D = x.shape
    return pl.pallas_call(
        _add_pe_kernel,
        out_shape=jax.ShapeDtypeStruct((B, S, D), x.dtype),
        grid_spec=pltpu.PrefetchScalarGridSpec(
            num_scalar_prefetch=0,
            grid=(1,),
            in_specs=[
                pl.BlockSpec((B, S, D), lambda i: (0, 0, 0)),
                pl.BlockSpec((S, D), lambda i: (0, 0)),
            ],
            out_specs=pl.BlockSpec((B, S, D), lambda i: (0, 0, 0)),
        ),
        compiler_params=pltpu.CompilerParams(
            dimension_semantics=("arbitrary",),
            vmem_limit_bytes=_VMEM_LIMIT_BYTES,
        ),
    )(x, pe)


def _add_pe_tiled(x, pe, block_rows=None):
    B, S, D = x.shape
    itemsize = jnp.dtype(x.dtype).itemsize
    sub = _min_row_multiple(itemsize)

    if block_rows is None:
        ts = _TARGET_BLOCK_BYTES // max(1, D * itemsize)
    else:
        ts = int(block_rows)
    ts = max(sub, (ts // sub) * sub)     # multiple of the sublane packing
    if ts >= S:
        ts = S                           # full-extent block is always legal
    n_s = pl.cdiv(S, ts)

    return pl.pallas_call(
        _add_pe_kernel,
        out_shape=jax.ShapeDtypeStruct((B, S, D), x.dtype),
        grid_spec=pltpu.PrefetchScalarGridSpec(
            num_scalar_prefetch=0,
            # Batch is the innermost (fastest-varying) axis, so the pe block index
            # (s, 0) is unchanged across consecutive steps -> pe stays resident in
            # VMEM instead of being re-DMA'd for every batch element.
            grid=(n_s, B),
            in_specs=[
                pl.BlockSpec((1, ts, D), lambda s, b: (b, s, 0)),   # x tile
                pl.BlockSpec((ts, D), lambda s, b: (s, 0)),         # pe tile (resident)
            ],
            out_specs=pl.BlockSpec((1, ts, D), lambda s, b: (b, s, 0)),
        ),
        compiler_params=pltpu.CompilerParams(
            dimension_semantics=("parallel", "parallel"),
            vmem_limit_bytes=_VMEM_LIMIT_BYTES,
        ),
    )(x, pe)


# ----------------------------------------------------------------------------- #
# Public wrapper — mirrors PositionalEncoding.forward(x) = x + pe[:, :S]
# ----------------------------------------------------------------------------- #
@functools.partial(jax.jit, static_argnames=("block_rows",))
def positional_encoding_forward(x: jnp.ndarray, pe_full: jnp.ndarray,
                                block_rows=None) -> jnp.ndarray:
    """x: (B, S, D); pe_full: (max_len, D). Returns x + pe[:S] (broadcast over batch)."""
    B, S, D = x.shape
    max_len = pe_full.shape[0]
    if S > max_len:
        raise ValueError(f"sequence length {S} exceeds max_len {max_len}")

    # Cast pe to the activation dtype in the wrapper (halves pe read traffic for bf16
    # activations and keeps the in-kernel add/store in a single dtype).
    pe = pe_full[:S, :].astype(x.dtype)

    # Lane-dense repack: if D < the 128-lane width (e.g. D=32) but S*D is a multiple
    # of 128, reshape so the last dim is exactly 128 -> unmasked full-width stores.
    if D % 128 != 0 and (S * D) % 128 == 0:
        rows, lanes = (S * D) // 128, 128
        xk = x.reshape(B, rows, lanes)
        pek = pe.reshape(rows, lanes)
    else:
        xk, pek = x, pe

    nbytes = xk.size * jnp.dtype(xk.dtype).itemsize
    if block_rows is None and nbytes <= _SMALL_BYTES:
        out = _add_pe_single_block(xk, pek)      # tiny shapes: one grid step
    else:
        out = _add_pe_tiled(xk, pek, block_rows)

    return out.reshape(B, S, D)


# ----------------------------------------------------------------------------- #
if __name__ == "__main__":
    MAX_LEN = 5000

    # Case 1: toy shape implied by the module (B=2, S=8, D=32).
    # Exercises the lane-dense repack (32 -> 128 lanes) and the single-block path.
    B, S, D = 2, 8, 32
    key = jax.random.PRNGKey(0)
    x = jax.random.normal(key, (B, S, D), dtype=jnp.float32)
    pe_full = make_positional_encoding(D, MAX_LEN)

    out = jax.block_until_ready(positional_encoding_forward(x, pe_full))
    ref = x + pe_full[None, :S, :]
    assert out.shape == (B, S, D)
    assert jnp.allclose(out, ref, atol=1e-6), "mismatch vs reference (small path)"

    # Case 2: medium shape, forcing the tiled path (batch-innermost grid,
    # resident pe tile, multi-step sequence tiling).
    B2, S2, D2 = 2, 512, 256
    x2 = jax.random.normal(jax.random.PRNGKey(0), (B2, S2, D2), dtype=jnp.float32)
    pe_full2 = make_positional_encoding(D2, MAX_LEN)

    out2 = jax.block_until_ready(
        positional_encoding_forward(x2, pe_full2, block_rows=128))
    ref2 = x2 + pe_full2[None, :S2, :]
    assert out2.shape == (B2, S2, D2)
    assert jnp.allclose(out2, ref2, atol=1e-6), "mismatch vs reference (tiled path)"

    print("KERNEL_OK")
</pallas_src>

<mosaic_0001>
module attributes {stable_mosaic.version = 11 : i64} {
  func.func @_add_pe_kernel(%arg0: i32, %arg1: memref<2x2x128xf32, #tpu.memory_space<vmem>>, %arg2: memref<2x128xf32, #tpu.memory_space<vmem>>, %arg3: memref<2x2x128xf32, #tpu.memory_space<vmem>>) attributes {dimension_semantics = [#tpu.dimension_semantics<arbitrary>], iteration_bounds = array<i64: 1>, scalar_prefetch = 0 : i64, scratch_operands = 0 : i64, tpu.core_type = #tpu.core_type<tc>, window_params = [{pipeline_mode = #tpu.pipeline_mode<synchronous>, transform_indices = @transform_0, window_bounds = array<i64: 2, 2, 128>}, {pipeline_mode = #tpu.pipeline_mode<synchronous>, transform_indices = @transform_1, window_bounds = array<i64: 2, 128>}, {pipeline_mode = #tpu.pipeline_mode<synchronous>, transform_indices = @transform_2, window_bounds = array<i64: 2, 2, 128>}]} {
    %c0 = arith.constant 0 : index
    %c0_0 = arith.constant 0 : index
    %c0_1 = arith.constant 0 : index
    %0 = vector.load %arg1[%c0, %c0_0, %c0_1] : memref<2x2x128xf32, #tpu.memory_space<vmem>>, vector<2x2x128xf32>
    %c0_2 = arith.constant 0 : index
    %c0_3 = arith.constant 0 : index
    %1 = vector.load %arg2[%c0_2, %c0_3] : memref<2x128xf32, #tpu.memory_space<vmem>>, vector<2x128xf32>
    %2 = vector.shape_cast %1 : vector<2x128xf32> to vector<1x2x128xf32>
    %3 = vector.broadcast %2 : vector<1x2x128xf32> to vector<2x2x128xf32>
    %4 = arith.addf %0, %3 : vector<2x2x128xf32>
    %c0_4 = arith.constant 0 : index
    %c0_5 = arith.constant 0 : index
    %c0_6 = arith.constant 0 : index
    %5 = vector.load %arg3[%c0_4, %c0_5, %c0_6] : memref<2x2x128xf32, #tpu.memory_space<vmem>>, vector<2x2x128xf32>
    tpu.vector_store %arg3[%c0_4, %c0_5, %c0_6], %4 {strides = array<i32>} : memref<2x2x128xf32, #tpu.memory_space<vmem>>, vector<2x2x128xf32>,
    return
  }
  func.func @transform_0(%arg0: i32) -> (i32, i32, i32) {
    %c0_i32 = arith.constant 0 : i32
    %c0_i32_0 = arith.constant 0 : i32
    %c0_i32_1 = arith.constant 0 : i32
    %c0_i32_2 = arith.constant 0 : i32
    return %c0_i32, %c0_i32_0, %c0_i32_1 : i32, i32, i32
  }
  func.func @transform_1(%arg0: i32) -> (i32, i32) {
    %c0_i32 = arith.constant 0 : i32
    %c0_i32_0 = arith.constant 0 : i32
    %c0_i32_1 = arith.constant 0 : i32
    return %c0_i32, %c0_i32_0 : i32, i32
  }
  func.func @transform_2(%arg0: i32) -> (i32, i32, i32) {
    %c0_i32 = arith.constant 0 : i32
    %c0_i32_0 = arith.constant 0 : i32
    %c0_i32_1 = arith.constant 0 : i32
    %c0_i32_2 = arith.constant 0 : i32
    return %c0_i32, %c0_i32_0, %c0_i32_1 : i32, i32, i32
  }
}

</mosaic_0001>

<llo_original>
// kernel: positional_encoding_forward.1
$region0: #{positional_encoding_forward.1}
  #allocation0 [shape = 'u32[]', space=smem, size = 0x4, offset = 0x4, fixed_abs, tag = 'smem constant byte address 0x4 - core index']
  #allocation1 [shape = 'u32[144,128]{1,0:T(1,128)}', space=vmem, size = 0x12000, scoped, tag = 'internal scratch']
  %s0 = inlined_call_operand.vmem [shape: f32[2,2,128], index: 0, kind: input, shape index: {}]
  %s1 = inlined_call_operand.vmem [shape: f32[2,128], index: 1, kind: input, shape index: {}]
  %s2 = inlined_call_operand.vmem [shape: f32[2,2,128], index: 2, kind: output, shape index: {}]
  %s3 = sld [smem:[#allocation0]]
  $region18: #{positional_encoding_forward.1} parent=0
    _
  %s5 = ssub.s32 1, %s3
  %s6 = scalar_select 0, %s5, %s3
  // Predicated region
  $region2: #{positional_encoding_forward.1} parent=0 // pred_check
    _
  $region3: #{positional_encoding_forward.1} parent=0 // pred_check_branch
    %8 = sbr.rel (0) target = $region5
  $region4: #{positional_encoding_forward.1} parent=0 // pred_region
    _
  $region5: #{positional_encoding_forward.1} parent=0 // pred_fallthru
    _
  // Predicated region
  $region6: #{positional_encoding_forward.1} parent=0 // pred_check
    _
  $region7: #{positional_encoding_forward.1} parent=0 // pred_check_branch
    %10 = sbr.rel (0) target = $region9
  $region8: #{positional_encoding_forward.1} parent=0 // pred_region
    _
  $region9: #{positional_encoding_forward.1} parent=0 // pred_fallthru
    _
  %v11 = vld [vmem:[%s0] sm:$0x3]
  %v12 = vld [vmem:[%s0 + $0x2] sm:$0x3]
  %v13 = vld [vmem:[%s1] sm:$0x3]
  %v14 = vadd.f32 %v11, %v13
  %v15 = vadd.f32 %v12, %v13
  %16 = vst [vmem:[%s2] sm:$0x3] %v14
  %17 = vst [vmem:[%s2 + $0x2] sm:$0x3] %v15
  // Predicated region
  $region10: #{positional_encoding_forward.1} parent=0 // pred_check
    _
  $region11: #{positional_encoding_forward.1} parent=0 // pred_check_branch
    %19 = sbr.rel (0) target = $region13
  $region12: #{positional_encoding_forward.1} parent=0 // pred_region
    _
  $region13: #{positional_encoding_forward.1} parent=0 // pred_fallthru
    _
  // Predicated region
  $region14: #{positional_encoding_forward.1} parent=0 // pred_check
    _
  $region15: #{positional_encoding_forward.1} parent=0 // pred_check_branch
    %21 = sbr.rel (0) target = $region17
  $region16: #{positional_encoding_forward.1} parent=0 // pred_region
    _
  $region17: #{positional_encoding_forward.1} parent=0 // pred_fallthru
    _

</llo_original>
